<compile_context>
chip_gen: v6e
topology: v6e:2x2x1
jax: 0.10.0
libtpu: 0.0.40
codegen_flags: <defaults>
</compile_context>

<pallas_src>
import functools

import jax
import jax.numpy as jnp
from jax.experimental import pallas as pl
from jax.experimental.pallas import tpu as pltpu


def _triplet_loss_kernel(a_ref, p_ref, n_ref, loss_ref, *, margin):
    """One (TB, D) batch tile -> (TB, 1) per-row hinge losses."""
    a = a_ref[...].astype(jnp.float32)
    p = p_ref[...].astype(jnp.float32)
    n = n_ref[...].astype(jnp.float32)

    # Squared euclidean distances, reduced over the feature axis (dim 1).
    d_ap = a - p
    d_an = a - n
    dist_pos = jnp.sum(d_ap * d_ap, axis=1, keepdims=True)      # (TB, 1)
    dist_neg = jnp.sum(d_an * d_an, axis=1, keepdims=True)      # (TB, 1)

    loss_ref[...] = jnp.maximum(dist_pos - dist_neg + margin, 0.0)


def _choose_tile_b(B, D, itemsize, target_bytes=1 << 20):
    """~1 MiB per input tile, sublane-aligned (multiple of 8), capped at B."""
    rows = (target_bytes // max(1, D * itemsize)) // 8 * 8
    rows = max(8, rows)
    if rows >= B:
        return B  # single full block: block dim == array dim, always legal
    return int(rows)


def triplet_loss(anchor, positive, negative, margin=1.0, *, tile_b=None):
    """Pallas implementation of TripletLoss.forward. Returns a scalar (f32)."""
    assert anchor.shape == positive.shape == negative.shape
    B, D = anchor.shape
    itemsize = jnp.dtype(anchor.dtype).itemsize

    if tile_b is None:
        tile_b = _choose_tile_b(B, D, itemsize)
    if tile_b >= B:
        tile_b = B                      # full-dim block, layout-legal for any B
    else:
        tile_b = max(8, (tile_b // 8) * 8)  # keep sublane (8) alignment

    num_tiles = pl.cdiv(B, tile_b)
    kernel = functools.partial(_triplet_loss_kernel, margin=float(margin))

    in_spec = pl.BlockSpec((tile_b, D), lambda i: (i, 0))
    per_row = pl.pallas_call(
        kernel,
        out_shape=jax.ShapeDtypeStruct((B, 1), jnp.float32),
        grid_spec=pltpu.PrefetchScalarGridSpec(
            num_scalar_prefetch=0,
            grid=(num_tiles,),
            in_specs=[in_spec, in_spec, in_spec],
            out_specs=pl.BlockSpec((tile_b, 1), lambda i: (i, 0)),
        ),
        compiler_params=pltpu.CompilerParams(
            # Independent per-tile work -> shard across both TCs on v7x.
            dimension_semantics=("parallel",),
        ),
    )(anchor, positive, negative)

    # Final reduction over B scalars is trivial; divide by the true batch size.
    return jnp.sum(per_row) / B


def triplet_loss_ref(anchor, positive, negative, margin=1.0):
    """Pure-JAX reference for sanity checking."""
    a = anchor.astype(jnp.float32)
    p = positive.astype(jnp.float32)
    n = negative.astype(jnp.float32)
    dp = jnp.sum((a - p) ** 2, axis=1)
    dn = jnp.sum((a - n) ** 2, axis=1)
    return jnp.mean(jnp.maximum(dp - dn + margin, 0.0))


if __name__ == "__main__":
    key = jax.random.PRNGKey(0)
    k_a, k_p, k_n = jax.random.split(key, 3)

    # Small embedding batch; B is deliberately NOT a multiple of the tile so
    # the ragged-last-tile (clipped writeback) path is exercised.
    B, D = 20, 128
    anchor = jax.random.normal(k_a, (B, D), dtype=jnp.float32)
    positive = jax.random.normal(k_p, (B, D), dtype=jnp.float32)
    negative = jax.random.normal(k_n, (B, D), dtype=jnp.float32)

    loss = triplet_loss(anchor, positive, negative, margin=1.0, tile_b=8)
    loss = jax.block_until_ready(loss)

    ref = triplet_loss_ref(anchor, positive, negative, margin=1.0)
    assert jnp.allclose(loss, ref, rtol=1e-5, atol=1e-5), (loss, ref)

    print("KERNEL_OK")
</pallas_src>

<mosaic_0001>
module attributes {stable_mosaic.version = 11 : i64} {
  func.func @_triplet_loss_kernel(%arg0: i32, %arg1: memref<8x128xf32, #tpu.memory_space<vmem>>, %arg2: memref<8x128xf32, #tpu.memory_space<vmem>>, %arg3: memref<8x128xf32, #tpu.memory_space<vmem>>, %arg4: memref<8x1xf32, #tpu.memory_space<vmem>>) attributes {dimension_semantics = [#tpu.dimension_semantics<parallel>], iteration_bounds = array<i64: 3>, scalar_prefetch = 0 : i64, scratch_operands = 0 : i64, tpu.core_type = #tpu.core_type<tc>, window_params = [{transform_indices = @transform_0, window_bounds = array<i64: 8, 128>}, {transform_indices = @transform_1, window_bounds = array<i64: 8, 128>}, {transform_indices = @transform_2, window_bounds = array<i64: 8, 128>}, {transform_indices = @transform_3, window_bounds = array<i64: 8, 1>}]} {
    %c0 = arith.constant 0 : index
    %c0_0 = arith.constant 0 : index
    %0 = vector.load %arg1[%c0, %c0_0] : memref<8x128xf32, #tpu.memory_space<vmem>>, vector<8x128xf32>
    %c0_1 = arith.constant 0 : index
    %c0_2 = arith.constant 0 : index
    %1 = vector.load %arg2[%c0_1, %c0_2] : memref<8x128xf32, #tpu.memory_space<vmem>>, vector<8x128xf32>
    %c0_3 = arith.constant 0 : index
    %c0_4 = arith.constant 0 : index
    %2 = vector.load %arg3[%c0_3, %c0_4] : memref<8x128xf32, #tpu.memory_space<vmem>>, vector<8x128xf32>
    %3 = arith.subf %0, %1 : vector<8x128xf32>
    %4 = arith.subf %0, %2 : vector<8x128xf32>
    %5 = arith.mulf %3, %3 : vector<8x128xf32>
    %cst = arith.constant dense<0.000000e+00> : vector<8xf32>
    %6 = vector.multi_reduction <add>, %5, %cst [1] : vector<8x128xf32> to vector<8xf32>
    %7 = vector.shape_cast %6 : vector<8xf32> to vector<8x1xf32>
    %8 = arith.mulf %4, %4 : vector<8x128xf32>
    %cst_5 = arith.constant dense<0.000000e+00> : vector<8xf32>
    %9 = vector.multi_reduction <add>, %8, %cst_5 [1] : vector<8x128xf32> to vector<8xf32>
    %10 = vector.shape_cast %9 : vector<8xf32> to vector<8x1xf32>
    %11 = arith.subf %7, %10 : vector<8x1xf32>
    %cst_6 = arith.constant 1.000000e+00 : f32
    %12 = vector.broadcast %cst_6 : f32 to vector<8x1xf32>
    %13 = arith.addf %11, %12 : vector<8x1xf32>
    %cst_7 = arith.constant 0.000000e+00 : f32
    %14 = vector.broadcast %cst_7 : f32 to vector<8x1xf32>
    %15 = arith.maximumf %13, %14 : vector<8x1xf32>
    %c0_8 = arith.constant 0 : index
    %c0_9 = arith.constant 0 : index
    %16 = vector.load %arg4[%c0_8, %c0_9] : memref<8x1xf32, #tpu.memory_space<vmem>>, vector<8x1xf32>
    tpu.vector_store %arg4[%c0_8, %c0_9], %15 {strides = array<i32>} : memref<8x1xf32, #tpu.memory_space<vmem>>, vector<8x1xf32>,
    return
  }
  func.func @transform_0(%arg0: i32) -> (i32, i32) {
    %c0_i32 = arith.constant 0 : i32
    %c0_i32_0 = arith.constant 0 : i32
    return %arg0, %c0_i32 : i32, i32
  }
  func.func @transform_1(%arg0: i32) -> (i32, i32) {
    %c0_i32 = arith.constant 0 : i32
    %c0_i32_0 = arith.constant 0 : i32
    return %arg0, %c0_i32 : i32, i32
  }
  func.func @transform_2(%arg0: i32) -> (i32, i32) {
    %c0_i32 = arith.constant 0 : i32
    %c0_i32_0 = arith.constant 0 : i32
    return %arg0, %c0_i32 : i32, i32
  }
  func.func @transform_3(%arg0: i32) -> (i32, i32) {
    %c0_i32 = arith.constant 0 : i32
    %c0_i32_0 = arith.constant 0 : i32
    return %arg0, %c0_i32 : i32, i32
  }
}

</mosaic_0001>

<llo_original>
// kernel: tpu_custom_call.1
$region0: #{tpu_custom_call.1}
  #allocation0 [shape = 'u32[]', space=smem, size = 0x4, offset = 0x4, fixed_abs, tag = 'smem constant byte address 0x4 - core index']
  #allocation1 [shape = 'u32[144,128]{1,0:T(1,128)}', space=vmem, size = 0x12000, scoped, tag = 'internal scratch']
  %s0 = inlined_call_operand.hbm [shape: f32[20,128], index: 0, kind: input, shape index: {}]
  %s1 = inlined_call_operand.hbm [shape: f32[20,128], index: 1, kind: input, shape index: {}]
  %s2 = inlined_call_operand.hbm [shape: f32[20,128], index: 2, kind: input, shape index: {}]
  %s3 = inlined_call_operand.vmem [shape: f32[20,1], index: 3, kind: output, shape index: {}]
  %s4 = sld [smem:[#allocation0]]
  $region57: #{tpu_custom_call.1} parent=0
    _
  %s6 = ssub.s32 1, %s4
  %s7 = scalar_select 0, %s6, %s4
  $region1: #{tpu_custom_call.1} parent=0
    #allocation2 [shape = 'u8[8192]{0}', space=vmem, size = 0x2000, scoped, tag = 'input window, operand 0']
    #allocation3 [shape = 's32[2]{0}', space=sflag, size = 0x8, scoped, tag = 'scoped memory for tpu_custom_call.1']
    #allocation4 [shape = 'u8[8192]{0}', space=vmem, size = 0x2000, scoped, tag = 'input window, operand 1']
    #allocation5 [shape = 's32[2]{0}', space=sflag, size = 0x8, scoped, tag = 'scoped memory for tpu_custom_call.1']
    #allocation6 [shape = 'u8[8192]{0}', space=vmem, size = 0x2000, scoped, tag = 'input window, operand 2']
    %8 = vsyncpa [#allocation3], 0
    %s9 = scalar_lea.sflag [#allocation3], 1
    %10 = vsyncpa %s9, 0
    %11 = vsyncpa [#allocation5], 0
    %s12 = scalar_lea.sflag [#allocation5], 1
    %13 = vsyncpa %s12, 0
    loop: start=0, step=1, limit=5
    $region2: #{tpu_custom_call.1} parent=1 // loop_pre_header
      _
    $region3: #{tpu_custom_call.1} parent=1 // loop_header
      %s15 = sphi 0, %s19
      %p16 = scmp.ge.s32.totalorder %s15, 5
      %s25 = sphi 0, %s27
      %s28 = sphi 0, %s25
      %s29 = sphi 0, %s28
      %s45 = sphi 0, %s29
      %s51 = sphi 0, %s53
      %s54 = sphi 0, %s51
      %s55 = sphi 0, %s54
      %s71 = sphi 0, %s55
      %s77 = sphi 0, %s79
      %s80 = sphi 0, %s77
      %s81 = sphi 0, %s80
      %s97 = sphi 0, %s81
      %s103 = sphi 0, %s105
      %s106 = sphi 0, %s103
      %s107 = sphi 0, %s106
      %s123 = sphi 0, %s107
    $region4: #{tpu_custom_call.1} parent=1 // loop_header_branch
      %18 = sbr.rel (%p16) target = $region8
    $region5: #{tpu_custom_call.1} parent=1 // loop_body
      %s20 = ssub.s32 %s15, 1
      %s21 = ssub.s32 %s15, 2
      %s22 = sadd.s32 %s15, 1
      %s23 = ssub.s32 %s15, %s22
      %p24 = scmp.eq.s32.totalorder %s23, 0
      %s26 = sadd.s32 %s25, 1
      %s27 = scalar_select %p24, %s25, %s26
      %p30 = pneg %p24
      %p31 = scmp.eq.s32.totalorder %s15, 2
      %p32 = por %p30, %p31
      %p33 = scmp.ne.s32.totalorder %s25, %s28
      %p34 = scmp.eq.s32.totalorder %s15, 0
      %p35 = por %p33, %p34
      %p36 = scmp.ne.s32.totalorder %s25, %s28
      %p37 = scmp.eq.s32.totalorder %s20, 2
      %p38 = por %p36, %p37
      %p39 = scmp.ne.s32.totalorder %s28, %s29
      %p40 = scmp.eq.s32.totalorder %s20, 0
      %p41 = por %p39, %p40
      %p42 = scmp.ne.s32.totalorder %s28, %s29
      %p43 = scmp.eq.s32.totalorder %s21, 2
      %p44 = por %p42, %p43
      %p46 = scmp.ne.s32.totalorder %s29, %s45
      %p47 = scmp.eq.s32.totalorder %s21, 0
      %p48 = por %p46, %p47
      %s49 = ssub.s32 %s15, %s22
      %p50 = scmp.eq.s32.totalorder %s49, 0
      %s52 = sadd.s32 %s51, 1
      %s53 = scalar_select %p50, %s51, %s52
      %p56 = pneg %p50
      %p57 = scmp.eq.s32.totalorder %s15, 2
      %p58 = por %p56, %p57
      %p59 = scmp.ne.s32.totalorder %s51, %s54
      %p60 = scmp.eq.s32.totalorder %s15, 0
      %p61 = por %p59, %p60
      %p62 = scmp.ne.s32.totalorder %s51, %s54
      %p63 = scmp.eq.s32.totalorder %s20, 2
      %p64 = por %p62, %p63
      %p65 = scmp.ne.s32.totalorder %s54, %s55
      %p66 = scmp.eq.s32.totalorder %s20, 0
      %p67 = por %p65, %p66
      %p68 = scmp.ne.s32.totalorder %s54, %s55
      %p69 = scmp.eq.s32.totalorder %s21, 2
      %p70 = por %p68, %p69
      %p72 = scmp.ne.s32.totalorder %s55, %s71
      %p73 = scmp.eq.s32.totalorder %s21, 0
      %p74 = por %p72, %p73
      %s75 = ssub.s32 %s15, %s22
      %p76 = scmp.eq.s32.totalorder %s75, 0
      %s78 = sadd.s32 %s77, 1
      %s79 = scalar_select %p76, %s77, %s78
      %p82 = pneg %p76
      %p83 = scmp.eq.s32.totalorder %s15, 2
      %p84 = por %p82, %p83
      %p85 = scmp.ne.s32.totalorder %s77, %s80
      %p86 = scmp.eq.s32.totalorder %s15, 0
      %p87 = por %p85, %p86
      %p88 = scmp.ne.s32.totalorder %s77, %s80
      %p89 = scmp.eq.s32.totalorder %s20, 2
      %p90 = por %p88, %p89
      %p91 = scmp.ne.s32.totalorder %s80, %s81
      %p92 = scmp.eq.s32.totalorder %s20, 0
      %p93 = por %p91, %p92
      %p94 = scmp.ne.s32.totalorder %s80, %s81
      %p95 = scmp.eq.s32.totalorder %s21, 2
      %p96 = por %p94, %p95
      %p98 = scmp.ne.s32.totalorder %s81, %s97
      %p99 = scmp.eq.s32.totalorder %s21, 0
      %p100 = por %p98, %p99
      %s101 = ssub.s32 %s15, %s22
      %p102 = scmp.eq.s32.totalorder %s101, 0
      %s104 = sadd.s32 %s103, 1
      %s105 = scalar_select %p102, %s103, %s104
      %p108 = pneg %p102
      %p109 = scmp.eq.s32.totalorder %s15, 2
      %p110 = por %p108, %p109
      %p111 = scmp.ne.s32.totalorder %s103, %s106
      %p112 = scmp.eq.s32.totalorder %s15, 0
      %p113 = por %p111, %p112
      %p114 = scmp.ne.s32.totalorder %s103, %s106
      %p115 = scmp.eq.s32.totalorder %s20, 2
      %p116 = por %p114, %p115
      %p117 = scmp.ne.s32.totalorder %s106, %s107
      %p118 = scmp.eq.s32.totalorder %s20, 0
      %p119 = por %p117, %p118
      %p120 = scmp.ne.s32.totalorder %s106, %s107
      %p121 = scmp.eq.s32.totalorder %s21, 2
      %p122 = por %p120, %p121
      %p124 = scmp.ne.s32.totalorder %s107, %s123
      %p125 = scmp.eq.s32.totalorder %s21, 0
      %p126 = por %p124, %p125
      %p127 = scmp.le.s32.totalorder 1, %s15
      %p128 = scmp.lt.s32.totalorder %s15, 4
      %p129 = pnand %p127, %p128
      %p130 = pneg %p129
      // Predicated region
      $region9: #{tpu_custom_call.1} parent=5 // pred_check
        _
      $region10: #{tpu_custom_call.1} parent=5 // pred_check_branch
        %132 = sbr.rel (%p129) target = $region12
      $region11: #{tpu_custom_call.1} parent=5 // pred_region
        %s133 = ssub.s32 %s15, 1
      $region12: #{tpu_custom_call.1} parent=5 // pred_fallthru
        _
      %p134 = scmp.lt.s32.totalorder %s15, 3
      // Predicated region
      $region13: #{tpu_custom_call.1} parent=5 // pred_check
        %p135 = pneg %p134
      $region14: #{tpu_custom_call.1} parent=5 // pred_check_branch
        %137 = sbr.rel (%p135) target = $region16
      $region15: #{tpu_custom_call.1} parent=5 // pred_region
        // Predicated region
        $region17: #{tpu_custom_call.1} parent=15 // pred_check
          %p138 = pneg %p35
        $region18: #{tpu_custom_call.1} parent=15 // pred_check_branch
          %140 = sbr.rel (%p138) target = $region20
        $region19: #{tpu_custom_call.1} parent=15 // pred_region
          %s141 = sand.u32 %s25, 1
          %s142 = scalar_lea.sflag [#allocation3], %s141
          %s143 = sand.u32 %s25, 1
          %s144 = smul.addr %s143, 8
          %s145 = scalar_lea.vmem [#allocation2], %s144
          %s147 = ssub.s32 128, 128
          %148 = vsyncadd %s142, %s147
          %s149 = smul.addr %s15, 128
          %s150 = scalar_lea.hbm %s0, %s149
          %s152 = sshll.u32 %s145, 4
          %s153 = int_to_ptr.vmem [resolvable:$true] %s152
          %155 = dma.hbm_to_vmem [thread:$0]  %s150, 128, %s153, %s142
        $region20: #{tpu_custom_call.1} parent=15 // pred_fallthru
          _
        // Predicated region
        $region21: #{tpu_custom_call.1} parent=15 // pred_check
          %p156 = pneg %p61
        $region22: #{tpu_custom_call.1} parent=15 // pred_check_branch
          %158 = sbr.rel (%p156) target = $region24
        $region23: #{tpu_custom_call.1} parent=15 // pred_region
          %s159 = sand.u32 %s15, 1
          %s160 = scalar_lea.sflag [#allocation5], %s159
          %s161 = sand.u32 %s51, 1
          %s162 = smul.addr %s161, 8
          %s163 = scalar_lea.vmem [#allocation4], %s162
          %s165 = ssub.s32 128, 128
          %166 = vsyncadd %s160, %s165
          %s167 = smul.addr %s15, 128
          %s168 = scalar_lea.hbm %s1, %s167
          %s170 = sshll.u32 %s163, 4
          %s171 = int_to_ptr.vmem [resolvable:$true] %s170
          %173 = dma.hbm_to_vmem [thread:$0]  %s168, 128, %s171, %s160
        $region24: #{tpu_custom_call.1} parent=15 // pred_fallthru
          _
        // Predicated region
        $region25: #{tpu_custom_call.1} parent=15 // pred_check
          %p174 = pneg %p87
        $region26: #{tpu_custom_call.1} parent=15 // pred_check_branch
          %176 = sbr.rel (%p174) target = $region28
        $region27: #{tpu_custom_call.1} parent=15 // pred_region
          %s177 = sand.u32 %s15, 1
          %s178 = scalar_lea.sflag [#allocation5], %s177
          %s179 = sand.u32 %s77, 1
          %s180 = smul.addr %s179, 8
          %s181 = scalar_lea.vmem [#allocation6], %s180
          %s183 = ssub.s32 128, 128
          %184 = vsyncadd %s178, %s183
          %s185 = smul.addr %s15, 128
          %s186 = scalar_lea.hbm %s2, %s185
          %s188 = sshll.u32 %s181, 4
          %s189 = int_to_ptr.vmem [resolvable:$true] %s188
          %191 = dma.hbm_to_vmem [thread:$0]  %s186, 128, %s189, %s178
        $region28: #{tpu_custom_call.1} parent=15 // pred_fallthru
          _
      $region16: #{tpu_custom_call.1} parent=5 // pred_fallthru
        _
      %p192 = scmp.le.s32.totalorder 1, %s15
      %p193 = scmp.lt.s32.totalorder %s15, 4
      %p194 = pnand %p192, %p193
      %p195 = pneg %p194
      // Predicated region
      $region29: #{tpu_custom_call.1} parent=5 // pred_check
        _
      $region30: #{tpu_custom_call.1} parent=5 // pred_check_branch
        %197 = sbr.rel (%p194) target = $region32
      $region31: #{tpu_custom_call.1} parent=5 // pred_region
        %s198 = ssub.s32 %s15, 1
        %s199 = sand.u32 %s28, 1
        %s200 = scalar_lea.sflag [#allocation3], %s199
        %s201 = sand.u32 %s28, 1
        %s202 = smul.addr %s201, 8
        %s203 = scalar_lea.vmem [#allocation2], %s202
        // Predicated region
        $region33: #{tpu_custom_call.1} parent=31 // pred_check
          %p204 = pneg %p41
        $region34: #{tpu_custom_call.1} parent=31 // pred_check_branch
          %206 = sbr.rel (%p204) target = $region36
        $region35: #{tpu_custom_call.1} parent=31 // pred_region
          %207 = dma.done %s200, 128
        $region36: #{tpu_custom_call.1} parent=31 // pred_fallthru
          _
        %s208 = sand.u32 %s20, 1
        %s209 = scalar_lea.sflag [#allocation5], %s208
        %s210 = sand.u32 %s54, 1
        %s211 = smul.addr %s210, 8
        %s212 = scalar_lea.vmem [#allocation4], %s211
        // Predicated region
        $region37: #{tpu_custom_call.1} parent=31 // pred_check
          %p213 = pneg %p67
        $region38: #{tpu_custom_call.1} parent=31 // pred_check_branch
          %215 = sbr.rel (%p213) target = $region40
        $region39: #{tpu_custom_call.1} parent=31 // pred_region
          %216 = dma.done %s209, 128
        $region40: #{tpu_custom_call.1} parent=31 // pred_fallthru
          _
        %s217 = sand.u32 %s20, 1
        %s218 = scalar_lea.sflag [#allocation5], %s217
        %s219 = sand.u32 %s80, 1
        %s220 = smul.addr %s219, 8
        %s221 = scalar_lea.vmem [#allocation6], %s220
        // Predicated region
        $region41: #{tpu_custom_call.1} parent=31 // pred_check
          %p222 = pneg %p93
        $region42: #{tpu_custom_call.1} parent=31 // pred_check_branch
          %224 = sbr.rel (%p222) target = $region44
        $region43: #{tpu_custom_call.1} parent=31 // pred_region
          %225 = dma.done %s218, 128
        $region44: #{tpu_custom_call.1} parent=31 // pred_fallthru
          _
        %s226 = sand.u32 %s28, 1
        %s227 = scalar_lea.sflag [#allocation3], %s226
        %s228 = sand.u32 %s28, 1
        %s229 = smul.addr %s228, 8
        %s230 = scalar_lea.vmem [#allocation2], %s229
        %p231 = pneg %p41
        %p232 = pneg %p38
        %s233 = sand.u32 %s20, 1
        %s234 = scalar_lea.sflag [#allocation5], %s233
        %s235 = sand.u32 %s54, 1
        %s236 = smul.addr %s235, 8
        %s237 = scalar_lea.vmem [#allocation4], %s236
        %p238 = pneg %p67
        %p239 = pneg %p64
        %s240 = sand.u32 %s20, 1
        %s241 = scalar_lea.sflag [#allocation5], %s240
        %s242 = sand.u32 %s80, 1
        %s243 = smul.addr %s242, 8
        %s244 = scalar_lea.vmem [#allocation6], %s243
        %p245 = pneg %p93
        %p246 = pneg %p90
        %p247 = pneg %p119
        %p248 = pneg %p116
        %p249 = scmp.lt.s32.totalorder %s20, 2
        %s250 = scalar_select %p249, %s20, 2
        %s251 = smul.addr %s250, 8
        %s252 = scalar_lea.vmem %s3, %s251
        %p253 = scmp.lt.s32.totalorder %s20, 2
        %s254 = scalar_select %p253, %s20, 2
        %s255 = smul.addr %s254, 8
        %s256 = scalar_lea.vmem %s3, %s255
        %v257 = vld [vmem:[%s203] sm:$0xff]
        %v258 = vld [vmem:[%s212] sm:$0xff]
        %v259 = vld [vmem:[%s221] sm:$0xff]
        %v260 = vsub.f32 %v257, %v258
        %v261 = vsub.f32 %v257, %v259
        %v262 = vmul.f32 %v260, %v260
        %263 = vadd.xlane.f32.xlu0 %v262
        %v264 = vpop.xlane.xlu0 %263
        %v265 = vmul.f32 %v261, %v261
        %266 = vadd.xlane.f32.xlu0 %v265
        %v267 = vpop.xlane.xlu0 %266
        %v268 = vsub.f32 %v264, %v267
        %v269 = vadd.f32 %v268, 1.0
        %v270 = vmax.f32 %v269, 0.0
        %vm271 = vcmask 7168
        %272 = vst.msk [vmem:[%s256] sm:$0xff] %vm271, %v270
        %p273 = scmp.lt.s32.totalorder %s20, 2
        %s274 = scalar_select %p273, %s20, 2
        %s275 = smul.addr %s274, 8
        %s276 = scalar_lea.vmem %s3, %s275
        // Predicated region
        $region45: #{tpu_custom_call.1} parent=31 // pred_check
          %p277 = pneg %p116
        $region46: #{tpu_custom_call.1} parent=31 // pred_check_branch
          %279 = sbr.rel (%p277) target = $region48
        $region47: #{tpu_custom_call.1} parent=31 // pred_region
          _
        $region48: #{tpu_custom_call.1} parent=31 // pred_fallthru
          _
      $region32: #{tpu_custom_call.1} parent=5 // pred_fallthru
        _
      %p280 = scmp.le.s32.totalorder 2, %s15
      // Predicated region
      $region49: #{tpu_custom_call.1} parent=5 // pred_check
        %p281 = pneg %p280
      $region50: #{tpu_custom_call.1} parent=5 // pred_check_branch
        %283 = sbr.rel (%p281) target = $region52
      $region51: #{tpu_custom_call.1} parent=5 // pred_region
        %s284 = ssub.s32 %s15, 2
        // Predicated region
        $region53: #{tpu_custom_call.1} parent=51 // pred_check
          %p285 = pneg %p122
        $region54: #{tpu_custom_call.1} parent=51 // pred_check_branch
          %287 = sbr.rel (%p285) target = $region56
        $region55: #{tpu_custom_call.1} parent=51 // pred_region
          %p288 = scmp.lt.s32.totalorder %s21, 2
          %s289 = scalar_select %p288, %s21, 2
          %s290 = smul.addr %s289, 8
          %s291 = scalar_lea.vmem %s3, %s290
        $region56: #{tpu_custom_call.1} parent=51 // pred_fallthru
          _
      $region52: #{tpu_custom_call.1} parent=5 // pred_fallthru
        _
    $region6: #{tpu_custom_call.1} parent=1 // loop_footer
      %s19 = sadd.s32 1, %s15
    $region7: #{tpu_custom_call.1} parent=1 // loop_footer_branch
      %14 = sbr.rel target = $region3
    $region8: #{tpu_custom_call.1} parent=1 // loop_exit
      _
    %292 = vsyncpa [#allocation3], 1
    %s293 = scalar_lea.sflag [#allocation3], 1
    %294 = vsyncpa %s293, 1
    %295 = vsyncpa [#allocation5], 1
    %s296 = scalar_lea.sflag [#allocation5], 1
    %297 = vsyncpa %s296, 1

</llo_original>
